<compile_context>
chip_gen: v6e
topology: v6e:2x2x1
jax: 0.10.0
libtpu: 0.0.40
codegen_flags: <defaults>
</compile_context>

<pallas_src>
import math

import jax
import jax.numpy as jnp
from jax.experimental import pallas as pl
from jax.experimental.pallas import tpu as pltpu

# ---------------- model config from the spec ----------------
B = 2            # batch (inputs stacked twice)
T = 6            # num_tokens == context_length
D_IN = 3         # d_in
D_OUT = 2        # d_out
DROPOUT_P = 0.5  # module config; eval-mode dropout is identity
# TODO(synk): training-mode dropout (p=0.5) on attn_weights is not implemented
#             (would need pltpu.prng_seed / pltpu.prng_random_bits + a mask).

LANE = 128
EP = LANE                       # q/k/v/output feature lanes (padded, lane-dense)
NEG_BIG = -1e30                 # finite additive mask (safe with max-subtraction)
SCALE = 1.0 / math.sqrt(D_OUT)  # torch: scores / keys.shape[-1]**0.5


def causal_attn_kernel(x_ref, wqkv_ref, bias_ref, o_ref):
    """Single invocation over the whole flattened problem.

    x_ref    : (B*T, D_IN)   f32 VMEM  (unpadded; Mosaic masks the K=3 dim)
    wqkv_ref : (D_IN, 3*EP)  f32 VMEM  (Wq*scale | Wk | Wv, each padded to EP lanes)
    bias_ref : (B*T, B*T)    f32 VMEM  (0 in same-batch causal window, -1e30 else)
    o_ref    : (B*T, EP)     f32 VMEM  (lane-dense padded context)
    """
    x = x_ref[...]
    wqkv = wqkv_ref[...]

    # Fused QKV projection: one MXU push group over all B*T rows.
    qkv = jnp.dot(x, wqkv, preferred_element_type=jnp.float32)    # (B*T, 3*EP)
    q = qkv[:, 0 * EP:1 * EP]   # 128-lane aligned slices (tile-aligned, free)
    k = qkv[:, 1 * EP:2 * EP]
    v = qkv[:, 2 * EP:3 * EP]

    # Scores over the flattened rows; one additive bias removes cross-batch and
    # future-token entries (block-diagonal causal mask).  The 1/sqrt(d_out) scale
    # is already folded into W_query, and the padded lanes contribute exactly 0.
    s = jax.lax.dot_general(q, k, (((1,), (1,)), ((), ())),
                            preferred_element_type=jnp.float32)   # (B*T, B*T)
    s = s + bias_ref[...]

    # Numerically stable softmax with an exact divide (EUP idle at this size).
    m = jnp.max(s, axis=-1, keepdims=True)
    p = jnp.exp(s - m)
    w = p / jnp.sum(p, axis=-1, keepdims=True)
    # eval-mode dropout (p=0.5) is identity -> no-op here.

    ctx = jnp.dot(w, v, preferred_element_type=jnp.float32)       # (B*T, EP)
    o_ref[...] = ctx.astype(o_ref.dtype)


def build_fused_qkv(wq, wk, wv):
    """Built once at init: fused (D_IN, 3*EP) weight, 1/sqrt(d_out) folded into Wq."""
    d_in, d_out = wq.shape
    wqkv = jnp.zeros((d_in, 3 * EP), jnp.float32)
    wqkv = wqkv.at[:, 0 * EP:0 * EP + d_out].set(wq * SCALE)
    wqkv = wqkv.at[:, 1 * EP:1 * EP + d_out].set(wk)
    wqkv = wqkv.at[:, 2 * EP:2 * EP + d_out].set(wv)
    return wqkv


def build_causal_bias(bsz, t):
    """Built once at init: additive block-diagonal causal bias for flattened rows."""
    n = bsz * t
    r = jnp.arange(n)
    ri, ci = r[:, None], r[None, :]
    ok = ((ri // t) == (ci // t)) & ((ci % t) <= (ri % t))
    return jnp.where(ok, 0.0, NEG_BIG).astype(jnp.float32)


@jax.jit
def causal_attention(x, wqkv, bias):
    """x: (B, T, D_IN) f32 -> (B, T, D_OUT) f32 (eval-mode CausalAttention.forward)."""
    bsz, t, d_in = x.shape
    xf = x.reshape(bsz * t, d_in)   # flatten batch*tokens into one MXU slab
    out_p = pl.pallas_call(
        causal_attn_kernel,
        out_shape=jax.ShapeDtypeStruct((bsz * t, EP), jnp.float32),
        # Gridless: the whole problem is a few KiB, so one invocation avoids all
        # per-step pipeline overhead.  If B/T scale up: add a q-tile grid with
        # dimension_semantics=("parallel", ...) so both v7x TensorCores are used,
        # size KV blocks against v7x's 64 MiB VMEM (not 128 MiB), and cast MXU
        # operands to bf16 (v6e/v7x) while keeping softmax math in f32.
        in_specs=[
            pl.BlockSpec(memory_space=pltpu.MemorySpace.VMEM),
            pl.BlockSpec(memory_space=pltpu.MemorySpace.VMEM),
            pl.BlockSpec(memory_space=pltpu.MemorySpace.VMEM),
        ],
        out_specs=pl.BlockSpec(memory_space=pltpu.MemorySpace.VMEM),
    )(xf, wqkv, bias)
    return out_p[:, :D_OUT].reshape(bsz, t, D_OUT)


def reference(x, wq, wk, wv):
    """Pure-JAX replica of CausalAttention.forward (eval mode) for verification."""
    t = x.shape[1]
    q = x @ wq
    k = x @ wk
    v = x @ wv
    s = jnp.einsum("bqd,bkd->bqk", q, k)
    mask = jnp.triu(jnp.ones((t, t), dtype=bool), k=1)
    s = jnp.where(mask, -jnp.inf, s)
    w = jax.nn.softmax(s / math.sqrt(D_OUT), axis=-1)
    return jnp.einsum("bqk,bkd->bqd", w, v)


if __name__ == "__main__":
    # The literal `inputs` tensor from the spec, stacked into a batch of 2.
    inputs = jnp.array(
        [[0.43, 0.15, 0.89],
         [0.55, 0.87, 0.66],
         [0.57, 0.85, 0.64],
         [0.22, 0.58, 0.33],
         [0.77, 0.25, 0.10],
         [0.05, 0.80, 0.55]], dtype=jnp.float32)
    x = jnp.stack([inputs, inputs], axis=0)            # (2, 6, 3)

    # nn.Linear(d_in, d_out, bias=False) weights stored pre-transposed as
    # (d_in, d_out); deterministic synthetic init (not a real checkpoint).
    key = jax.random.PRNGKey(0)
    kq, kk, kv = jax.random.split(key, 3)
    wq = jax.random.uniform(kq, (D_IN, D_OUT), jnp.float32, -0.5, 0.5)
    wk = jax.random.uniform(kk, (D_IN, D_OUT), jnp.float32, -0.5, 0.5)
    wv = jax.random.uniform(kv, (D_IN, D_OUT), jnp.float32, -0.5, 0.5)

    # Hoisted init-time constants (pure functions of weights / config).
    wqkv = build_fused_qkv(wq, wk, wv)                 # (3, 384)
    bias = build_causal_bias(B, T)                     # (12, 12)

    out = causal_attention(x, wqkv, bias)
    out = jax.block_until_ready(out)

    ref = reference(x, wq, wk, wv)
    assert out.shape == (B, T, D_OUT)
    # Exact softmax divide now; tolerance only covers MXU f32 pass rounding
    # (previous version needed 2e-3 because of the approx reciprocal).
    assert jnp.allclose(out, ref, atol=1e-3, rtol=1e-3), "mismatch vs reference"

    print("KERNEL_OK")
</pallas_src>

<mosaic_0001>
module attributes {stable_mosaic.version = 11 : i64} {
  func.func @causal_attn_kernel(%arg0: memref<12x3xf32, #tpu.memory_space<vmem>>, %arg1: memref<3x384xf32, #tpu.memory_space<vmem>>, %arg2: memref<12x12xf32, #tpu.memory_space<vmem>>, %arg3: memref<12x128xf32, #tpu.memory_space<vmem>>) attributes {dimension_semantics = [], scalar_prefetch = 0 : i64, scratch_operands = 0 : i64, tpu.core_type = #tpu.core_type<tc>} {
    %c0 = arith.constant 0 : index
    %c0_0 = arith.constant 0 : index
    %0 = vector.load %arg0[%c0, %c0_0] : memref<12x3xf32, #tpu.memory_space<vmem>>, vector<12x3xf32>
    %c0_1 = arith.constant 0 : index
    %c0_2 = arith.constant 0 : index
    %1 = vector.load %arg1[%c0_1, %c0_2] : memref<3x384xf32, #tpu.memory_space<vmem>>, vector<3x384xf32>
    %cst = arith.constant dense<0.000000e+00> : vector<12x384xf32>
    %2 = tpu.matmul %0, %1, %cst {dimension_numbers = #tpu.dot_dimension_numbers<[1], [0], [0], [1], [0, 0, 1, 1], [], []>} : vector<12x3xf32>, vector<3x384xf32>, vector<12x384xf32> -> vector<12x384xf32>
    %3 = vector.extract_strided_slice %2 {offsets = [0, 0], sizes = [12, 128], strides = [1, 1]} : vector<12x384xf32> to vector<12x128xf32>
    %4 = vector.extract_strided_slice %2 {offsets = [0, 128], sizes = [12, 128], strides = [1, 1]} : vector<12x384xf32> to vector<12x128xf32>
    %5 = vector.extract_strided_slice %2 {offsets = [0, 256], sizes = [12, 128], strides = [1, 1]} : vector<12x384xf32> to vector<12x128xf32>
    %cst_3 = arith.constant dense<0.000000e+00> : vector<12x12xf32>
    %6 = tpu.matmul %3, %4, %cst_3 {dimension_numbers = #tpu.dot_dimension_numbers<[1], [1], [0], [0], [0, 0, 1, 0], [], []>} : vector<12x128xf32>, vector<12x128xf32>, vector<12x12xf32> -> vector<12x12xf32>
    %c0_4 = arith.constant 0 : index
    %c0_5 = arith.constant 0 : index
    %7 = vector.load %arg2[%c0_4, %c0_5] : memref<12x12xf32, #tpu.memory_space<vmem>>, vector<12x12xf32>
    %8 = arith.addf %6, %7 : vector<12x12xf32>
    %cst_6 = arith.constant dense<0xFF800000> : vector<12xf32>
    %9 = vector.multi_reduction <maximumf>, %8, %cst_6 [1] : vector<12x12xf32> to vector<12xf32>
    %10 = vector.shape_cast %9 : vector<12xf32> to vector<12x1xf32>
    %11 = vector.broadcast %10 : vector<12x1xf32> to vector<12x12xf32>
    %12 = arith.subf %8, %11 : vector<12x12xf32>
    %13 = math.exp %12 : vector<12x12xf32>
    %cst_7 = arith.constant dense<0.000000e+00> : vector<12xf32>
    %14 = vector.multi_reduction <add>, %13, %cst_7 [1] : vector<12x12xf32> to vector<12xf32>
    %15 = vector.shape_cast %14 : vector<12xf32> to vector<12x1xf32>
    %16 = vector.broadcast %15 : vector<12x1xf32> to vector<12x12xf32>
    %17 = arith.divf %13, %16 : vector<12x12xf32>
    %cst_8 = arith.constant dense<0.000000e+00> : vector<12x128xf32>
    %18 = tpu.matmul %17, %5, %cst_8 {dimension_numbers = #tpu.dot_dimension_numbers<[1], [0], [0], [1], [0, 0, 1, 1], [], []>} : vector<12x12xf32>, vector<12x128xf32>, vector<12x128xf32> -> vector<12x128xf32>
    %c0_9 = arith.constant 0 : index
    %c0_10 = arith.constant 0 : index
    %19 = vector.load %arg3[%c0_9, %c0_10] : memref<12x128xf32, #tpu.memory_space<vmem>>, vector<12x128xf32>
    tpu.vector_store %arg3[%c0_9, %c0_10], %18 {strides = array<i32>} : memref<12x128xf32, #tpu.memory_space<vmem>>, vector<12x128xf32>,
    return
  }
}

</mosaic_0001>

<llo_original>
// kernel: causal_attention.1
$region0: #{causal_attention.1}
  #allocation0 [shape = 'u32[]', space=smem, size = 0x4, offset = 0x4, fixed_abs, tag = 'smem constant byte address 0x4 - core index']
  #allocation1 [shape = 'u32[144,128]{1,0:T(1,128)}', space=vmem, size = 0x12000, scoped, tag = 'internal scratch']
  %s0 = inlined_call_operand.vmem [shape: f32[12,3], index: 0, kind: input, shape index: {}]
  %s1 = inlined_call_operand.vmem [shape: f32[3,384], index: 1, kind: input, shape index: {}]
  %s2 = inlined_call_operand.vmem [shape: f32[12,12], index: 2, kind: input, shape index: {}]
  %s3 = inlined_call_operand.vmem [shape: f32[12,128], index: 3, kind: output, shape index: {}]
  %s4 = sld [smem:[#allocation0]]
  $region22: #{causal_attention.1} parent=0
    _
  %s6 = ssub.s32 1, %s4
  %s7 = scalar_select 0, %s6, %s4
  // Predicated region
  $region2: #{causal_attention.1} parent=0 // pred_check
    _
  $region3: #{causal_attention.1} parent=0 // pred_check_branch
    %9 = sbr.rel (0) target = $region5
  $region4: #{causal_attention.1} parent=0 // pred_region
    _
  $region5: #{causal_attention.1} parent=0 // pred_fallthru
    _
  // Predicated region
  $region6: #{causal_attention.1} parent=0 // pred_check
    _
  $region7: #{causal_attention.1} parent=0 // pred_check_branch
    %11 = sbr.rel (0) target = $region9
  $region8: #{causal_attention.1} parent=0 // pred_region
    _
  $region9: #{causal_attention.1} parent=0 // pred_fallthru
    _
  // Predicated region
  $region10: #{causal_attention.1} parent=0 // pred_check
    _
  $region11: #{causal_attention.1} parent=0 // pred_check_branch
    %13 = sbr.rel (0) target = $region13
  $region12: #{causal_attention.1} parent=0 // pred_region
    _
  $region13: #{causal_attention.1} parent=0 // pred_fallthru
    _
  %v14 = vld [vmem:[%s0] sm:$0xff]
  %v15 = vld [vmem:[%s0 + $0x8] sm:$0xf]
  %v16 = vld [vmem:[%s1] sm:$0x77]
  %v17 = vld [vmem:[%s1 + $0x8] sm:$0x7]
  %v20 = vcombine.high %v16, %v16
  %vm21 = vcmask 23552
  %v23 = vsel %vm21, %v14, 0
  %v26 = vsel %vm21, %v15, 0
  %vm28 = vcmask 1042432
  %v29 = vsel %vm28, %v16, 0
  %v31 = vsel %vm28, %v20, 0
  %v33 = vsel %vm28, %v17, 0
  %35 = vmatprep.subr.mxu0 0.0
  %36 = vmatpush1.msra.mxu0 0.0
  %37 = vmatprep.subr.mxu0 0.0
  %38 = vmatpush1.msra.mxu0 0.0
  %39 = vmatprep.subr.mxu0 0.0
  %40 = vmatpush1.msra.mxu0 0.0
  %41 = vmatprep.subr.mxu0 0.0
  %42 = vmatpush1.msra.mxu0 0.0
  %43 = vmatprep.subr.mxu0 0.0
  %44 = vmatpush1.msra.mxu0 0.0
  %45 = vmatprep.subr.mxu0 0.0
  %46 = vmatpush1.msra.mxu0 0.0
  %47 = vmatprep.subr.mxu0 0.0
  %48 = vmatpush1.msra.mxu0 0.0
  %49 = vmatprep.subr.mxu0 0.0
  %50 = vmatpush1.msra.mxu0 0.0
  %51 = vmatprep.subr.mxu0 0.0
  %52 = vmatpush1.msra.mxu0 0.0
  %53 = vmatprep.subr.mxu0 0.0
  %54 = vmatpush1.msra.mxu0 0.0
  %55 = vmatprep.subr.mxu0 0.0
  %56 = vmatpush1.msra.mxu0 0.0
  %57 = vmatprep.subr.mxu0 0.0
  %58 = vmatpush1.msra.mxu0 0.0
  %59 = vmatprep.subr.mxu0 0.0
  %60 = vmatpush1.msra.mxu0 0.0
  %61 = vmatprep.subr.mxu0 0.0
  %62 = vmatpush1.msra.mxu0 0.0
  %63 = vmatprep.subr.mxu0 0.0
  %64 = vmatpush1.msra.mxu0 0.0
  %65 = vmatprep.subr.mxu0 %v31
  %66 = vmatpush1.msra.mxu0 %v29
  %67 = vmatprep.subr.mxu0 0.0
  %68 = vmatpush2.msra.mxu0 0.0
  %69 = vmatprep.subr.mxu0 0.0
  %70 = vmatpush2.msra.mxu0 0.0
  %71 = vmatprep.subr.mxu0 0.0
  %72 = vmatpush2.msra.mxu0 0.0
  %73 = vmatprep.subr.mxu0 0.0
  %74 = vmatpush2.msra.mxu0 0.0
  %75 = vmatprep.subr.mxu0 0.0
  %76 = vmatpush2.msra.mxu0 0.0
  %77 = vmatprep.subr.mxu0 0.0
  %78 = vmatpush2.msra.mxu0 0.0
  %79 = vmatprep.subr.mxu0 0.0
  %80 = vmatpush2.msra.mxu0 0.0
  %81 = vmatprep.subr.mxu0 0.0
  %82 = vmatpush2.msra.mxu0 0.0
  %83 = vmatprep.subr.mxu0 0.0
  %84 = vmatpush2.msra.mxu0 0.0
  %85 = vmatprep.subr.mxu0 0.0
  %86 = vmatpush2.msra.mxu0 0.0
  %87 = vmatprep.subr.mxu0 0.0
  %88 = vmatpush2.msra.mxu0 0.0
  %89 = vmatprep.subr.mxu0 0.0
  %90 = vmatpush2.msra.mxu0 0.0
  %91 = vmatprep.subr.mxu0 0.0
  %92 = vmatpush2.msra.mxu0 0.0
  %93 = vmatprep.subr.mxu0 0.0
  %94 = vmatpush2.msra.mxu0 0.0
  %95 = vmatprep.subr.mxu0 0.0
  %96 = vmatpush2.msra.mxu0 0.0
  %97 = vmatprep.subr.mxu0 0.0
  %98 = vmatpush2.msra.mxu0 0.0
  %99 = vmatprep.mubr.f32.mxu0 0.0
  %100 = vmatmul.mubr.f32.gmra.mxu0 %v23
  %v101 = vpop.f32.mrf.mxu0
  %v102 = vadd.f32 0.0, %v101
  %v103 = vpop.f32.mrf.mxu0
  %v104 = vadd.f32 0.0, %v103
  %105 = vmatprep.mubr.f32.mxu0 0.0
  %106 = vmatmul.mubr.f32.gmra.mxu0 %v26
  %v107 = vpop.f32.mrf.mxu0
  %v108 = vadd.f32 0.0, %v107
  %v109 = vpop.f32.mrf.mxu0
  %v110 = vadd.f32 0.0, %v109
  %111 = vdwg.mxu0
  %112 = vmatprep.subr.mxu0 0.0
  %113 = vmatpush1.msra.mxu0 0.0
  %114 = vmatprep.subr.mxu0 0.0
  %115 = vmatpush1.msra.mxu0 0.0
  %116 = vmatprep.subr.mxu0 0.0
  %117 = vmatpush1.msra.mxu0 0.0
  %118 = vmatprep.subr.mxu0 0.0
  %119 = vmatpush1.msra.mxu0 0.0
  %120 = vmatprep.subr.mxu0 0.0
  %121 = vmatpush1.msra.mxu0 0.0
  %122 = vmatprep.subr.mxu0 0.0
  %123 = vmatpush1.msra.mxu0 0.0
  %124 = vmatprep.subr.mxu0 0.0
  %125 = vmatpush1.msra.mxu0 0.0
  %126 = vmatprep.subr.mxu0 0.0
  %127 = vmatpush1.msra.mxu0 0.0
  %128 = vmatprep.subr.mxu0 0.0
  %129 = vmatpush1.msra.mxu0 0.0
  %130 = vmatprep.subr.mxu0 0.0
  %131 = vmatpush1.msra.mxu0 0.0
  %132 = vmatprep.subr.mxu0 0.0
  %133 = vmatpush1.msra.mxu0 0.0
  %134 = vmatprep.subr.mxu0 0.0
  %135 = vmatpush1.msra.mxu0 0.0
  %136 = vmatprep.subr.mxu0 0.0
  %137 = vmatpush1.msra.mxu0 0.0
  %138 = vmatprep.subr.mxu0 0.0
  %139 = vmatpush1.msra.mxu0 0.0
  %140 = vmatprep.subr.mxu0 0.0
  %141 = vmatpush1.msra.mxu0 0.0
  %142 = vmatprep.subr.mxu0 0.0
  %143 = vmatpush1.msra.mxu0 %v33
  %144 = vmatprep.subr.mxu0 0.0
  %145 = vmatpush2.msra.mxu0 0.0
  %146 = vmatprep.subr.mxu0 0.0
  %147 = vmatpush2.msra.mxu0 0.0
  %148 = vmatprep.subr.mxu0 0.0
  %149 = vmatpush2.msra.mxu0 0.0
  %150 = vmatprep.subr.mxu0 0.0
  %151 = vmatpush2.msra.mxu0 0.0
  %152 = vmatprep.subr.mxu0 0.0
  %153 = vmatpush2.msra.mxu0 0.0
  %154 = vmatprep.subr.mxu0 0.0
  %155 = vmatpush2.msra.mxu0 0.0
  %156 = vmatprep.subr.mxu0 0.0
  %157 = vmatpush2.msra.mxu0 0.0
  %158 = vmatprep.subr.mxu0 0.0
  %159 = vmatpush2.msra.mxu0 0.0
  %160 = vmatprep.subr.mxu0 0.0
  %161 = vmatpush2.msra.mxu0 0.0
  %162 = vmatprep.subr.mxu0 0.0
  %163 = vmatpush2.msra.mxu0 0.0
  %164 = vmatprep.subr.mxu0 0.0
  %165 = vmatpush2.msra.mxu0 0.0
  %166 = vmatprep.subr.mxu0 0.0
  %167 = vmatpush2.msra.mxu0 0.0
  %168 = vmatprep.subr.mxu0 0.0
  %169 = vmatpush2.msra.mxu0 0.0
  %170 = vmatprep.subr.mxu0 0.0
  %171 = vmatpush2.msra.mxu0 0.0
  %172 = vmatprep.subr.mxu0 0.0
  %173 = vmatpush2.msra.mxu0 0.0
  %174 = vmatprep.subr.mxu0 0.0
  %175 = vmatpush2.msra.mxu0 0.0
  %176 = vmatprep.mubr.f32.mxu0 0.0
  %177 = vmatmul.mubr.f32.gmra.mxu0 %v23
  %v178 = vpop.f32.mrf.mxu0
  %v179 = vadd.f32 0.0, %v178
  %v180 = vpop.f32.mrf.mxu0
  %181 = vmatprep.mubr.f32.mxu0 0.0
  %182 = vmatmul.mubr.f32.gmra.mxu0 %v26
  %v183 = vpop.f32.mrf.mxu0
  %v184 = vadd.f32 0.0, %v183
  %v185 = vpop.f32.mrf.mxu0
  %186 = vdwg.mxu0
  %v187 = vld [vmem:[%s2] sm:$0xff]
  %v188 = vld [vmem:[%s2 + $0x8] sm:$0xf]
  %189 = vmatprep.subr.mxu0 0.0
  %190 = vmatpush1.xpose.msra.mxu0 0.0
  %191 = vmatprep.subr.mxu0 0.0
  %192 = vmatpush1.xpose.msra.mxu0 0.0
  %193 = vmatprep.subr.mxu0 0.0
  %194 = vmatpush1.xpose.msra.mxu0 0.0
  %195 = vmatprep.subr.mxu0 0.0
  %196 = vmatpush1.xpose.msra.mxu0 0.0
  %197 = vmatprep.subr.mxu0 0.0
  %198 = vmatpush1.xpose.msra.mxu0 0.0
  %199 = vmatprep.subr.mxu0 0.0
  %200 = vmatpush1.xpose.msra.mxu0 0.0
  %201 = vmatprep.subr.mxu0 0.0
  %202 = vmatpush1.xpose.msra.mxu0 0.0
  %203 = vmatprep.subr.mxu0 0.0
  %204 = vmatpush1.xpose.msra.mxu0 0.0
  %205 = vmatprep.subr.mxu0 0.0
  %206 = vmatpush1.xpose.msra.mxu0 0.0
  %207 = vmatprep.subr.mxu0 0.0
  %208 = vmatpush1.xpose.msra.mxu0 0.0
  %209 = vmatprep.subr.mxu0 0.0
  %210 = vmatpush1.xpose.msra.mxu0 0.0
  %211 = vmatprep.subr.mxu0 0.0
  %212 = vmatpush1.xpose.msra.mxu0 0.0
  %213 = vmatprep.subr.mxu0 0.0
  %214 = vmatpush1.xpose.msra.mxu0 0.0
  %215 = vmatprep.subr.mxu0 0.0
  %216 = vmatpush1.xpose.msra.mxu0 0.0
  %217 = vmatprep.subr.mxu0 0.0
  %218 = vmatpush1.xpose.msra.mxu0 %v110
  %219 = vmatprep.subr.mxu0 0.0
  %220 = vmatpush1.xpose.msra.mxu0 %v104
  %221 = vmatprep.subr.mxu0 0.0
  %222 = vmatpush2.xpose.msra.mxu0 0.0
  %223 = vmatprep.subr.mxu0 0.0
  %224 = vmatpush2.xpose.msra.mxu0 0.0
  %225 = vmatprep.subr.mxu0 0.0
  %226 = vmatpush2.xpose.msra.mxu0 0.0
  %227 = vmatprep.subr.mxu0 0.0
  %228 = vmatpush2.xpose.msra.mxu0 0.0
  %229 = vmatprep.subr.mxu0 0.0
  %230 = vmatpush2.xpose.msra.mxu0 0.0
  %231 = vmatprep.subr.mxu0 0.0
  %232 = vmatpush2.xpose.msra.mxu0 0.0
  %233 = vmatprep.subr.mxu0 0.0
  %234 = vmatpush2.xpose.msra.mxu0 0.0
  %235 = vmatprep.subr.mxu0 0.0
  %236 = vmatpush2.xpose.msra.mxu0 0.0
  %237 = vmatprep.subr.mxu0 0.0
  %238 = vmatpush2.xpose.msra.mxu0 0.0
  %239 = vmatprep.subr.mxu0 0.0
  %240 = vmatpush2.xpose.msra.mxu0 0.0
  %241 = vmatprep.subr.mxu0 0.0
  %242 = vmatpush2.xpose.msra.mxu0 0.0
  %243 = vmatprep.subr.mxu0 0.0
  %244 = vmatpush2.xpose.msra.mxu0 0.0
  %245 = vmatprep.subr.mxu0 0.0
  %246 = vmatpush2.xpose.msra.mxu0 0.0
  %247 = vmatprep.subr.mxu0 0.0
  %248 = vmatpush2.xpose.msra.mxu0 0.0
  %249 = vmatprep.subr.mxu0 0.0
  %250 = vmatpush2.xpose.msra.mxu0 0.0
  %251 = vmatprep.subr.mxu0 0.0
  %252 = vmatpush2.xpose.msra.mxu0 0.0
  %253 = vmatprep.mubr.f32.mxu0 0.0
  %254 = vmatmul.mubr.f32.gmra.mxu0 %v102
  %v255 = vpop.f32.mrf.mxu0
  %v256 = vadd.f32 %v187, %v255
  %v257 = vpop.f32.mrf.mxu0
  %258 = vmatprep.mubr.f32.mxu0 0.0
  %259 = vmatmul.mubr.f32.gmra.mxu0 %v108
  %v260 = vpop.f32.mrf.mxu0
  %v261 = vadd.f32 %v188, %v260
  %v262 = vpop.f32.mrf.mxu0
  %263 = vdwg.mxu0
  %vm264 = vcmask 97280
  %v265 = vsel %vm264, %v256, -inf
  %266 = vmax.xlane.f32.xlu0 %v265
  %v267 = vpop.xlane.xlu0 %266
  %vm268 = vcmask 93184
  %v269 = vsel %vm268, %v261, -inf
  %270 = vmax.xlane.f32.xlu0 %v269
  %v271 = vpop.xlane.xlu0 %270
  %v272 = vsub.f32 %v256, %v267
  %v273 = vsub.f32 %v261, %v271
  %v274 = vmul.f32 %v272, 1.442695
  %v275 = vpow.pop %v274
  %v276 = vmul.f32 %v273, 1.442695
  %v277 = vpow.pop %v276
  %v278 = vsel %vm264, %v275, 0.0
  %279 = vadd.xlane.f32.xlu0 %v278
  %v280 = vpop.xlane.xlu0 %279
  %v281 = vsel %vm268, %v277, 0.0
  %282 = vadd.xlane.f32.xlu0 %v281
  %v283 = vpop.xlane.xlu0 %282
  %v284 = vrcp.pop %v280
  %v285 = vmul.f32 %v275, %v284
  %v286 = vrcp.pop %v283
  %v287 = vmul.f32 %v277, %v286
  %v289 = vsel %vm264, %v285, 0
  %v292 = vsel %vm264, %v287, 0
  %vm294 = vcmask 1043456
  %v296 = vsel %vm294, %v184, 0
  %298 = vmatprep.subr.mxu0 0.0
  %299 = vmatpush1.msra.mxu0 0.0
  %300 = vmatprep.subr.mxu0 0.0
  %301 = vmatpush1.msra.mxu0 0.0
  %302 = vmatprep.subr.mxu0 0.0
  %303 = vmatpush1.msra.mxu0 0.0
  %304 = vmatprep.subr.mxu0 0.0
  %305 = vmatpush1.msra.mxu0 0.0
  %306 = vmatprep.subr.mxu0 0.0
  %307 = vmatpush1.msra.mxu0 0.0
  %308 = vmatprep.subr.mxu0 0.0
  %309 = vmatpush1.msra.mxu0 0.0
  %310 = vmatprep.subr.mxu0 0.0
  %311 = vmatpush1.msra.mxu0 0.0
  %312 = vmatprep.subr.mxu0 0.0
  %313 = vmatpush1.msra.mxu0 0.0
  %314 = vmatprep.subr.mxu0 0.0
  %315 = vmatpush1.msra.mxu0 0.0
  %316 = vmatprep.subr.mxu0 0.0
  %317 = vmatpush1.msra.mxu0 0.0
  %318 = vmatprep.subr.mxu0 0.0
  %319 = vmatpush1.msra.mxu0 0.0
  %320 = vmatprep.subr.mxu0 0.0
  %321 = vmatpush1.msra.mxu0 0.0
  %322 = vmatprep.subr.mxu0 0.0
  %323 = vmatpush1.msra.mxu0 0.0
  %324 = vmatprep.subr.mxu0 0.0
  %325 = vmatpush1.msra.mxu0 0.0
  %326 = vmatprep.subr.mxu0 0.0
  %327 = vmatpush1.msra.mxu0 %v296
  %328 = vmatprep.subr.mxu0 0.0
  %329 = vmatpush1.msra.mxu0 %v179
  %330 = vmatprep.subr.mxu0 0.0
  %331 = vmatpush2.msra.mxu0 0.0
  %332 = vmatprep.subr.mxu0 0.0
  %333 = vmatpush2.msra.mxu0 0.0
  %334 = vmatprep.subr.mxu0 0.0
  %335 = vmatpush2.msra.mxu0 0.0
  %336 = vmatprep.subr.mxu0 0.0
  %337 = vmatpush2.msra.mxu0 0.0
  %338 = vmatprep.subr.mxu0 0.0
  %339 = vmatpush2.msra.mxu0 0.0
  %340 = vmatprep.subr.mxu0 0.0
  %341 = vmatpush2.msra.mxu0 0.0
  %342 = vmatprep.subr.mxu0 0.0
  %343 = vmatpush2.msra.mxu0 0.0
  %344 = vmatprep.subr.mxu0 0.0
  %345 = vmatpush2.msra.mxu0 0.0
  %346 = vmatprep.subr.mxu0 0.0
  %347 = vmatpush2.msra.mxu0 0.0
  %348 = vmatprep.subr.mxu0 0.0
  %349 = vmatpush2.msra.mxu0 0.0
  %350 = vmatprep.subr.mxu0 0.0
  %351 = vmatpush2.msra.mxu0 0.0
  %352 = vmatprep.subr.mxu0 0.0
  %353 = vmatpush2.msra.mxu0 0.0
  %354 = vmatprep.subr.mxu0 0.0
  %355 = vmatpush2.msra.mxu0 0.0
  %356 = vmatprep.subr.mxu0 0.0
  %357 = vmatpush2.msra.mxu0 0.0
  %358 = vmatprep.subr.mxu0 0.0
  %359 = vmatpush2.msra.mxu0 0.0
  %360 = vmatprep.subr.mxu0 0.0
  %361 = vmatpush2.msra.mxu0 0.0
  %362 = vmatprep.mubr.f32.mxu0 0.0
  %363 = vmatmul.mubr.f32.gmra.mxu0 %v289
  %v364 = vpop.f32.mrf.mxu0
  %v365 = vadd.f32 0.0, %v364
  %v366 = vpop.f32.mrf.mxu0
  %367 = vmatprep.mubr.f32.mxu0 0.0
  %368 = vmatmul.mubr.f32.gmra.mxu0 %v292
  %v369 = vpop.f32.mrf.mxu0
  %v370 = vadd.f32 0.0, %v369
  %v371 = vpop.f32.mrf.mxu0
  %372 = vdwg.mxu0
  %373 = vst [vmem:[%s3] sm:$0xff] %v365
  %374 = vst [vmem:[%s3 + $0x8] sm:$0xf] %v370
  // Predicated region
  $region14: #{causal_attention.1} parent=0 // pred_check
    _
  $region15: #{causal_attention.1} parent=0 // pred_check_branch
    %376 = sbr.rel (0) target = $region17
  $region16: #{causal_attention.1} parent=0 // pred_region
    _
  $region17: #{causal_attention.1} parent=0 // pred_fallthru
    _
  // Predicated region
  $region18: #{causal_attention.1} parent=0 // pred_check
    _
  $region19: #{causal_attention.1} parent=0 // pred_check_branch
    %378 = sbr.rel (0) target = $region21
  $region20: #{causal_attention.1} parent=0 // pred_region
    _
  $region21: #{causal_attention.1} parent=0 // pred_fallthru
    _

</llo_original>
